<compile_context>
chip_gen: v6e
topology: v6e:2x2x1
jax: 0.10.0
libtpu: 0.0.40
codegen_flags: <defaults>
</compile_context>

<pallas_src>
import functools

import jax
import jax.numpy as jnp
from jax import lax
from jax.experimental import pallas as pl
from jax.experimental.pallas import tpu as pltpu

ALPHA = 0.8
GAMMA = 2

_LANES = 128
_SUBLANES = 8
_GRAIN = _SUBLANES * _LANES       # 1024 elements = one (8,128) f32 vreg
_MAX_BLOCK_ROWS = 4096            # 4096 x 128 f32 = 2 MiB per input per block


def _bce_sum_kernel(x_ref, t_ref, o_ref, *, total_rows, block_rows,
                    chunk_rows, inner, needs_mask):
    """Accumulate sum of per-element BCE-with-logits into o_ref (8,128)."""
    c = pl.program_id(0)          # outer "parallel" split (v7x TensorCores)
    i = pl.program_id(1)          # inner reduction axis

    @pl.when(i == 0)
    def _init():
        o_ref[...] = jnp.zeros_like(o_ref)

    # Global row offset this block *claims* (may exceed total_rows for
    # phantom/ragged blocks; those rows are masked to zero below).
    block_row0 = (c * inner + i) * block_rows

    def chunk_body(k, acc):
        r = pl.multiple_of(k * chunk_rows, chunk_rows)
        x = x_ref[pl.ds(r, chunk_rows), :].astype(jnp.float32)
        t = t_ref[pl.ds(r, chunk_rows), :].astype(jnp.float32)

        # Numerically stable fused BCE-with-logits: softplus(x) - t*x,
        # softplus(x) = max(x,0) + log1p(exp(-|x|)).
        bce = jnp.maximum(x, 0.0) - t * x + jnp.log1p(jnp.exp(-jnp.abs(x)))
        # Mirror PyTorch's -100 log clamp (exact for binary targets).
        bce = jnp.minimum(bce, 100.0)

        if needs_mask:
            rows = (block_row0 + r
                    + lax.broadcasted_iota(jnp.int32, (chunk_rows, _LANES), 0))
            # jnp.where is a select: garbage (even NaN/Inf) in masked rows
            # cannot leak into the accumulator.
            bce = jnp.where(rows < total_rows, bce, 0.0)

        # Reduce (chunk_rows,128) -> (8,128) with sublane-aligned slice adds:
        # pure VALU vreg+vreg, no reshape, no materialized temporary.
        for s in range(chunk_rows // _SUBLANES):
            acc = acc + bce[s * _SUBLANES:(s + 1) * _SUBLANES, :]
        return acc

    acc = lax.fori_loop(0, block_rows // chunk_rows, chunk_body,
                        jnp.zeros((_SUBLANES, _LANES), jnp.float32))
    o_ref[...] += acc


def focal_loss(inputs, targets, alpha=ALPHA, gamma=GAMMA):
    """Pallas TPU implementation of FocalLoss.forward. Returns a scalar f32.

    Inputs/targets may be any floating (or integer mask) dtype; they are
    streamed from HBM in their native dtype and cast to f32 in-register.
    """
    x = inputs.reshape(-1)
    t = targets.reshape(-1)
    n = x.shape[0]

    # Rare fallback: only if n is not a multiple of 1024 do we pad (with
    # "neutral" values: logit=+100, target=1 -> per-element BCE == 0) so the
    # flat -> (rows, 128) reshape is legal.  Typical UNet shapes skip this
    # entirely, so the reshapes below are metadata-only (no HBM copies).
    pad = (-n) % _GRAIN
    if pad:
        x = jnp.pad(x, (0, pad), constant_values=100.0)
        t = jnp.pad(t, (0, pad), constant_values=1.0)

    total_rows = x.shape[0] // _LANES          # multiple of 8 by construction
    x2 = x.reshape(total_rows, _LANES)
    t2 = t.reshape(total_rows, _LANES)

    # Block sizing: whole array as one block if small, else 4096-row blocks
    # (2 MiB f32/input; ~8 MiB double-buffered -> safe on v7x's 64 MiB VMEM).
    block_rows = min(_MAX_BLOCK_ROWS, total_rows)
    chunk_rows = _SUBLANES
    for cand in (64, 32, 16, 8):
        if block_rows % cand == 0:
            chunk_rows = cand
            break

    num_blocks = -(-total_rows // block_rows)
    # Outer "parallel" axis: lets v7x's 2 TensorCores each own roughly half the
    # rows with a private resident accumulator; sequential on 1-TC chips.
    # (If profiling shows only one v7x core active, switch this axis to
    #  pltpu.CORE_PARALLEL.)
    num_splits = 2 if num_blocks >= 2 else 1
    inner = -(-num_blocks // num_splits)
    # Mask needed whenever the grid covers more rows than exist (ragged last
    # block and/or phantom blocks from an odd split).
    needs_mask = (num_splits * inner * block_rows) != total_rows

    def in_map(c, i):
        # Clamp phantom blocks onto the last real block; the kernel zeroes
        # their contribution via the row mask.
        return (jnp.minimum(c * inner + i, num_blocks - 1), 0)

    kernel = functools.partial(
        _bce_sum_kernel,
        total_rows=total_rows, block_rows=block_rows, chunk_rows=chunk_rows,
        inner=inner, needs_mask=needs_mask)

    bytes_accessed = (x2.size * x2.dtype.itemsize
                      + t2.size * t2.dtype.itemsize
                      + num_splits * _SUBLANES * _LANES * 4)
    cost = pl.CostEstimate(flops=8 * n, transcendentals=2 * n,
                           bytes_accessed=bytes_accessed)

    partials = pl.pallas_call(
        kernel,
        out_shape=jax.ShapeDtypeStruct((num_splits * _SUBLANES, _LANES),
                                       jnp.float32),
        grid_spec=pltpu.PrefetchScalarGridSpec(
            num_scalar_prefetch=0,
            grid=(num_splits, inner),
            in_specs=[
                pl.BlockSpec((block_rows, _LANES), in_map),
                pl.BlockSpec((block_rows, _LANES), in_map),
            ],
            out_specs=pl.BlockSpec((_SUBLANES, _LANES), lambda c, i: (c, 0)),
        ),
        compiler_params=pltpu.CompilerParams(
            dimension_semantics=("parallel", "arbitrary"),
        ),
        cost_estimate=cost,
    )(x2, t2)

    # Tiny scalar epilogue: combine per-core partials, mean, focal transform.
    # gamma stays an integer power (single multiply; no exp/log, no NaN risk).
    bce_mean = jnp.sum(partials) / jnp.float32(n)
    bce_exp = jnp.exp(-bce_mean)
    return alpha * (1.0 - bce_exp) ** gamma * bce_mean


def _focal_loss_ref(inputs, targets, alpha=ALPHA, gamma=GAMMA):
    # PyTorch semantics: sigmoid -> binary_cross_entropy (log clamp -100) -> focal.
    p = jax.nn.sigmoid(inputs.reshape(-1).astype(jnp.float32))
    t = targets.reshape(-1).astype(jnp.float32)
    log_p = jnp.maximum(jnp.log(p), -100.0)
    log_1mp = jnp.maximum(jnp.log(1.0 - p), -100.0)
    bce = jnp.mean(-(t * log_p + (1.0 - t) * log_1mp))
    return alpha * (1.0 - jnp.exp(-bce)) ** gamma * bce


if __name__ == "__main__":
    key = jax.random.PRNGKey(0)
    k1, k2 = jax.random.split(key)
    # Small NCHW shapes consistent with a UNet logits/mask pair.
    x = jax.random.normal(k1, (2, 4, 16, 16), dtype=jnp.float32)
    tgt = jax.random.bernoulli(k2, p=0.5, shape=(2, 4, 16, 16)).astype(jnp.float32)

    out = jax.block_until_ready(focal_loss(x, tgt))
    ref = jax.block_until_ready(_focal_loss_ref(x, tgt))
    assert jnp.allclose(out, ref, rtol=1e-4, atol=1e-6), (out, ref)
    print("KERNEL_OK")
</pallas_src>

<mosaic_0001>
module attributes {stable_mosaic.version = 11 : i64} {
  func.func @_bce_sum_kernel(%arg0: i32, %arg1: i32, %arg2: memref<16x128xf32, #tpu.memory_space<vmem>>, %arg3: memref<16x128xf32, #tpu.memory_space<vmem>>, %arg4: memref<8x128xf32, #tpu.memory_space<vmem>>) attributes {dimension_semantics = [#tpu.dimension_semantics<parallel>, #tpu.dimension_semantics<arbitrary>], iteration_bounds = array<i64: 1, 1>, scalar_prefetch = 0 : i64, scratch_operands = 0 : i64, tpu.core_type = #tpu.core_type<tc>, window_params = [{transform_indices = @transform_0, window_bounds = array<i64: 16, 128>}, {transform_indices = @transform_1, window_bounds = array<i64: 16, 128>}, {transform_indices = @transform_2, window_bounds = array<i64: 8, 128>}]} {
    %c0_i32 = arith.constant 0 : i32
    %0 = arith.cmpi eq, %arg1, %c0_i32 : i32
    %1 = arith.extui %0 : i1 to i32
    %c0_i32_0 = arith.constant 0 : i32
    %2 = arith.cmpi ne, %1, %c0_i32_0 : i32
    scf.if %2 {
      %cst_10 = arith.constant 0.000000e+00 : f32
      %29 = vector.broadcast %cst_10 : f32 to vector<8x128xf32>
      %c0_11 = arith.constant 0 : index
      %c0_12 = arith.constant 0 : index
      %30 = vector.load %arg4[%c0_11, %c0_12] : memref<8x128xf32, #tpu.memory_space<vmem>>, vector<8x128xf32>
      tpu.vector_store %arg4[%c0_11, %c0_12], %29 {strides = array<i32>} : memref<8x128xf32, #tpu.memory_space<vmem>>, vector<8x128xf32>,
    } else {
    }
    %cst = arith.constant 0.000000e+00 : f32
    %3 = vector.broadcast %cst : f32 to vector<8x128xf32>
    %c0_i32_1 = arith.constant 0 : i32
    %c16_i32 = arith.constant 16 : i32
    %4 = arith.muli %c0_i32_1, %c16_i32 : i32
    %5 = tpu.assume_multiple %4, 16 : i32
    %6 = arith.index_cast %5 : i32 to index
    %c0 = arith.constant 0 : index
    %7 = vector.load %arg2[%6, %c0] : memref<16x128xf32, #tpu.memory_space<vmem>>, vector<16x128xf32>
    %8 = arith.index_cast %5 : i32 to index
    %c0_2 = arith.constant 0 : index
    %9 = vector.load %arg3[%8, %c0_2] : memref<16x128xf32, #tpu.memory_space<vmem>>, vector<16x128xf32>
    %cst_3 = arith.constant 0.000000e+00 : f32
    %10 = vector.broadcast %cst_3 : f32 to vector<16x128xf32>
    %11 = arith.maximumf %7, %10 : vector<16x128xf32>
    %12 = arith.mulf %9, %7 : vector<16x128xf32>
    %13 = arith.subf %11, %12 : vector<16x128xf32>
    %14 = math.absf %7 : vector<16x128xf32>
    %cst_4 = arith.constant 0.000000e+00 : f32
    %15 = vector.broadcast %cst_4 : f32 to vector<16x128xf32>
    %16 = arith.subf %15, %14 : vector<16x128xf32>
    %17 = math.exp %16 : vector<16x128xf32>
    %18 = math.log1p %17 : vector<16x128xf32>
    %19 = arith.addf %13, %18 : vector<16x128xf32>
    %cst_5 = arith.constant 1.000000e+02 : f32
    %20 = vector.broadcast %cst_5 : f32 to vector<16x128xf32>
    %21 = arith.minimumf %19, %20 : vector<16x128xf32>
    %22 = vector.extract_strided_slice %21 {offsets = [0, 0], sizes = [8, 128], strides = [1, 1]} : vector<16x128xf32> to vector<8x128xf32>
    %23 = arith.addf %3, %22 : vector<8x128xf32>
    %24 = vector.extract_strided_slice %21 {offsets = [8, 0], sizes = [8, 128], strides = [1, 1]} : vector<16x128xf32> to vector<8x128xf32>
    %25 = arith.addf %23, %24 : vector<8x128xf32>
    %c1_i32 = arith.constant 1 : i32
    %c0_6 = arith.constant 0 : index
    %c0_7 = arith.constant 0 : index
    %26 = vector.load %arg4[%c0_6, %c0_7] : memref<8x128xf32, #tpu.memory_space<vmem>>, vector<8x128xf32>
    %27 = arith.addf %26, %25 : vector<8x128xf32>
    %c0_8 = arith.constant 0 : index
    %c0_9 = arith.constant 0 : index
    %28 = vector.load %arg4[%c0_8, %c0_9] : memref<8x128xf32, #tpu.memory_space<vmem>>, vector<8x128xf32>
    tpu.vector_store %arg4[%c0_8, %c0_9], %27 {strides = array<i32>} : memref<8x128xf32, #tpu.memory_space<vmem>>, vector<8x128xf32>,
    return
  }
  func.func @transform_0(%arg0: i32, %arg1: i32) -> (i32, i32) {
    %c1_i32 = arith.constant 1 : i32
    %0 = arith.muli %arg0, %c1_i32 : i32
    %1 = arith.addi %0, %arg1 : i32
    %c0_i32 = arith.constant 0 : i32
    %2 = arith.minsi %1, %c0_i32 : i32
    %c0_i32_0 = arith.constant 0 : i32
    %c0_i32_1 = arith.constant 0 : i32
    return %2, %c0_i32_0 : i32, i32
  }
  func.func @transform_1(%arg0: i32, %arg1: i32) -> (i32, i32) {
    %c1_i32 = arith.constant 1 : i32
    %0 = arith.muli %arg0, %c1_i32 : i32
    %1 = arith.addi %0, %arg1 : i32
    %c0_i32 = arith.constant 0 : i32
    %2 = arith.minsi %1, %c0_i32 : i32
    %c0_i32_0 = arith.constant 0 : i32
    %c0_i32_1 = arith.constant 0 : i32
    return %2, %c0_i32_0 : i32, i32
  }
  func.func @transform_2(%arg0: i32, %arg1: i32) -> (i32, i32) {
    %c0_i32 = arith.constant 0 : i32
    %c0_i32_0 = arith.constant 0 : i32
    return %arg0, %c0_i32 : i32, i32
  }
}

</mosaic_0001>

<llo_original>
// kernel: tpu_custom_call.1
$region0: #{tpu_custom_call.1}
  #allocation0 [shape = 'u32[]', space=smem, size = 0x4, offset = 0x4, fixed_abs, tag = 'smem constant byte address 0x4 - core index']
  #allocation1 [shape = 'u32[144,128]{1,0:T(1,128)}', space=vmem, size = 0x12000, scoped, tag = 'internal scratch']
  %s0 = inlined_call_operand.hbm [shape: f32[16,128], index: 0, kind: input, shape index: {}]
  %s1 = inlined_call_operand.hbm [shape: f32[16,128], index: 1, kind: input, shape index: {}]
  %s2 = inlined_call_operand.hbm [shape: f32[8,128], index: 2, kind: output, shape index: {}]
  %s3 = sld [smem:[#allocation0]]
  $region30: #{tpu_custom_call.1} parent=0
    _
  %s5 = ssub.s32 1, %s3
  %s6 = scalar_select 0, %s5, %s3
  $region1: #{tpu_custom_call.1} parent=0
    #allocation2 [shape = 'u8[8192]{0}', space=vmem, size = 0x2000, scoped, tag = 'input window, operand 0, single buffered']
    #allocation3 [shape = 's32[1]{0}', space=sflag, size = 0x4, scoped, tag = 'scoped memory for tpu_custom_call.1']
    #allocation4 [shape = 's32[1]{0}', space=sflag, size = 0x4, scoped, tag = 'scoped memory for tpu_custom_call.1']
    #allocation5 [shape = 'u8[8192]{0}', space=vmem, size = 0x2000, scoped, tag = 'input window, operand 1, single buffered']
    #allocation6 [shape = 's32[1]{0}', space=sflag, size = 0x4, scoped, tag = 'scoped memory for tpu_custom_call.1']
    #allocation7 [shape = 'u8[4096]{0}', space=vmem, size = 0x1000, scoped, tag = 'output window, operand 0, single buffered']
    %7 = vsyncpa [#allocation3], 0
    %8 = vsyncpa [#allocation6], 0
    %9 = vsyncpa [#allocation4], 0
    // Predicated region
    $region2: #{tpu_custom_call.1} parent=1 // pred_check
      _
    $region3: #{tpu_custom_call.1} parent=1 // pred_check_branch
      %11 = sbr.rel (0) target = $region5
    $region4: #{tpu_custom_call.1} parent=1 // pred_region
      %s12 = sadd.s32 0, 0
      %p13 = scmp.lt.s32.totalorder %s12, 0
      %s14 = scalar_select %p13, %s12, 0
      %s15 = smul.u32 2, %s14
      %s17 = ssub.s32 256, 256
      %18 = vsyncadd [#allocation3], %s17
      %s19 = smul.addr %s15, 128
      %s20 = scalar_lea.hbm %s0, %s19
      %s21 = sshll.u32 [#allocation2], 4
      %s22 = int_to_ptr.vmem [resolvable:$true] %s21
      %27 = dma.hbm_to_vmem [thread:$0]  %s20, 256, %s22, [#allocation3], 128, 128, 8
    $region5: #{tpu_custom_call.1} parent=1 // pred_fallthru
      _
    // Predicated region
    $region6: #{tpu_custom_call.1} parent=1 // pred_check
      _
    $region7: #{tpu_custom_call.1} parent=1 // pred_check_branch
      %29 = sbr.rel (0) target = $region9
    $region8: #{tpu_custom_call.1} parent=1 // pred_region
      %s30 = sadd.s32 0, 0
      %p31 = scmp.lt.s32.totalorder %s30, 0
      %s32 = scalar_select %p31, %s30, 0
      %s33 = smul.u32 2, %s32
      %s35 = ssub.s32 256, 256
      %36 = vsyncadd [#allocation6], %s35
      %s37 = smul.addr %s33, 128
      %s38 = scalar_lea.hbm %s1, %s37
      %s39 = sshll.u32 [#allocation5], 4
      %s40 = int_to_ptr.vmem [resolvable:$true] %s39
      %45 = dma.hbm_to_vmem [thread:$0]  %s38, 256, %s40, [#allocation6], 128, 128, 8
    $region9: #{tpu_custom_call.1} parent=1 // pred_fallthru
      _
    // Predicated region
    $region10: #{tpu_custom_call.1} parent=1 // pred_check
      _
    $region11: #{tpu_custom_call.1} parent=1 // pred_check_branch
      %47 = sbr.rel (0) target = $region13
    $region12: #{tpu_custom_call.1} parent=1 // pred_region
      %48 = dma.done [#allocation3], 256
    $region13: #{tpu_custom_call.1} parent=1 // pred_fallthru
      _
    // Predicated region
    $region14: #{tpu_custom_call.1} parent=1 // pred_check
      _
    $region15: #{tpu_custom_call.1} parent=1 // pred_check_branch
      %50 = sbr.rel (0) target = $region17
    $region16: #{tpu_custom_call.1} parent=1 // pred_region
      %51 = dma.done [#allocation6], 256
    $region17: #{tpu_custom_call.1} parent=1 // pred_fallthru
      _
    %s52 = sadd.s32 0, 0
    %p53 = scmp.lt.s32.totalorder %s52, 0
    %s54 = scalar_select %p53, %s52, 0
    %s55 = smul.u32 2, %s54
    %s56 = sadd.s32 0, 0
    %p57 = scmp.lt.s32.totalorder %s56, 0
    %s58 = scalar_select %p57, %s56, 0
    %s59 = smul.u32 2, %s58
    %p60 = scmp.eq.s32.totalorder 0, 0
    // Predicated region
    $region18: #{tpu_custom_call.1} parent=1 // pred_check
      %p61 = pneg %p60
    $region19: #{tpu_custom_call.1} parent=1 // pred_check_branch
      %63 = sbr.rel (%p61) target = $region21
    $region20: #{tpu_custom_call.1} parent=1 // pred_region
      %64 = vst [vmem:[#allocation7] sm:$0xff] 0.0
    $region21: #{tpu_custom_call.1} parent=1 // pred_fallthru
      _
    %v65 = vld [vmem:[#allocation2] sm:$0xff]
    %v66 = vld [vmem:[#allocation2 + $0x8] sm:$0xff]
    %v67 = vld [vmem:[#allocation5] sm:$0xff]
    %v68 = vld [vmem:[#allocation5 + $0x8] sm:$0xff]
    %v69 = vmax.f32 %v65, 0.0
    %v70 = vmax.f32 %v66, 0.0
    %v71 = vmul.f32 %v67, %v65
    %v72 = vmul.f32 %v68, %v66
    %v73 = vsub.f32 %v69, %v71
    %v74 = vsub.f32 %v70, %v72
    %v75 = vand.u32 2147483647, %v65
    %v76 = vand.u32 2147483647, %v66
    %v77 = vsub.f32 0.0, %v75
    %v78 = vsub.f32 0.0, %v76
    %v79 = vmul.f32 %v77, 1.442695
    %v80 = vpow.pop %v79
    %v81 = vmul.f32 %v78, 1.442695
    %v82 = vpow.pop %v81
    %v83 = vadd.f32 %v80, 1.0
    %v84 = vlog2.pop %v83
    %v85 = vmul.f32 %v84, 0.6931472
    %v86 = vmul.f32 -0.5, %v80
    %v87 = vadd.f32 %v86, 1.0
    %v88 = vmul.f32 %v87, %v80
    %v89 = vand.u32 2147483647, %v80
    %vm90 = vcmp.lt.f32.partialorder %v89, 0.0004427343
    %v91 = vsel %vm90, %v88, %v85
    %v92 = vadd.f32 %v82, 1.0
    %v93 = vlog2.pop %v92
    %v94 = vmul.f32 %v93, 0.6931472
    %v95 = vmul.f32 -0.5, %v82
    %v96 = vadd.f32 %v95, 1.0
    %v97 = vmul.f32 %v96, %v82
    %v98 = vand.u32 2147483647, %v82
    %vm99 = vcmp.lt.f32.partialorder %v98, 0.0004427343
    %v100 = vsel %vm99, %v97, %v94
    %v101 = vadd.f32 %v73, %v91
    %v102 = vadd.f32 %v74, %v100
    %v103 = vmin.f32 %v101, 100.0
    %v104 = vmin.f32 %v102, 100.0
    %v105 = vadd.f32 %v103, 0.0
    %v106 = vadd.f32 %v105, %v104
    %v107 = vld [vmem:[#allocation7] sm:$0xff]
    %v108 = vadd.f32 %v107, %v106
    %109 = vst [vmem:[#allocation7] sm:$0xff] %v108
    // Predicated region
    $region22: #{tpu_custom_call.1} parent=1 // pred_check
      _
    $region23: #{tpu_custom_call.1} parent=1 // pred_check_branch
      %111 = sbr.rel (0) target = $region25
    $region24: #{tpu_custom_call.1} parent=1 // pred_region
      %s113 = ssub.s32 128, 128
      %114 = vsyncadd [#allocation4], %s113
      %s116 = sshll.u32 [#allocation7], 4
      %s117 = int_to_ptr.vmem [resolvable:$true] %s116
      %119 = dma.vmem_to_hbm [thread:$0]  %s117, 128, %s2, [#allocation4]
    $region25: #{tpu_custom_call.1} parent=1 // pred_fallthru
      _
    // Predicated region
    $region26: #{tpu_custom_call.1} parent=1 // pred_check
      _
    $region27: #{tpu_custom_call.1} parent=1 // pred_check_branch
      %121 = sbr.rel (0) target = $region29
    $region28: #{tpu_custom_call.1} parent=1 // pred_region
      %122 = dma.done [#allocation4], 128
    $region29: #{tpu_custom_call.1} parent=1 // pred_fallthru
      _
    %123 = vsyncpa [#allocation3], 1
    %124 = vsyncpa [#allocation6], 1
    %125 = vsyncpa [#allocation4], 1

</llo_original>
